<compile_context>
chip_gen: v6e
topology: v6e:2x2x1
jax: 0.10.0
libtpu: 0.0.40
codegen_flags: <defaults>
</compile_context>

<pallas_src>
import functools

import jax
import jax.numpy as jnp
from jax.experimental import pallas as pl
from jax.experimental.pallas import tpu as pltpu

SMOOTH_NR = 1e-5
SMOOTH_DR = 1e-5
_LANE = 128


def _round_up(x, m):
    return ((x + m - 1) // m) * m


def _seg_loss_kernel(pred_ref, tgt_ref, out_ref, inter_sc, denom_sc, bce_sc, *,
                     n_rows, n_cols, tm, tk, n_row_tiles,
                     need_row_mask, need_col_mask):
    c = pl.program_id(0)          # core split (parallel)
    i = pl.program_id(1)          # row tile within this core
    k = pl.program_id(2)          # spatial tile
    nk = pl.num_programs(2)

    # Zero the per-core (dice_sum, bce_sum) accumulator once per core.
    @pl.when(jnp.logical_and(i == 0, k == 0))
    def _():
        out_ref[...] = jnp.zeros_like(out_ref)

    # Reset per-row partial sums at the start of each spatial sweep.
    @pl.when(k == 0)
    def _():
        inter_sc[...] = jnp.zeros_like(inter_sc)
        denom_sc[...] = jnp.zeros_like(denom_sc)
        bce_sc[...] = jnp.zeros_like(bce_sc)

    x = pred_ref[...].astype(jnp.float32)   # (tm, tk) logits
    t = tgt_ref[...].astype(jnp.float32)    # (tm, tk) targets

    # One exp per element, shared between sigmoid and the stable BCE log term.
    e = jnp.exp(-jnp.abs(x))
    s = jnp.where(x >= 0.0, 1.0, e) / (1.0 + e)        # == sigmoid(x), exact
    bce = jnp.maximum(x, 0.0) - x * t + jnp.log1p(e)   # stable BCE-with-logits

    s_sq = s * s
    if need_col_mask:
        col = jax.lax.broadcasted_iota(jnp.int32, x.shape, 1) + k * tk
        cmask = (col < n_cols).astype(jnp.float32)
        s_sq = s_sq * cmask        # padded cols: sigmoid(0)=0.5 must not leak in
        bce = bce * cmask          # padded cols: log(2) must not leak in
        # padded target columns are zero-padded, so t*s and t*t need no masking

    inter_sc[...] += jnp.sum(t * s, axis=-1, keepdims=True)
    denom_sc[...] += jnp.sum(t * t + s_sq, axis=-1, keepdims=True)
    bce_sc[...] += jnp.sum(bce, axis=-1, keepdims=True)

    # Finalize this row tile: per-row dice, collapse to scalars, accumulate.
    @pl.when(k == nk - 1)
    def _():
        dice_r = 1.0 - (2.0 * inter_sc[...] + SMOOTH_NR) / (denom_sc[...] + SMOOTH_DR)
        bce_r = bce_sc[...]
        if need_row_mask:
            row = (jax.lax.broadcasted_iota(jnp.int32, (tm, 1), 0)
                   + (c * n_row_tiles + i) * tm)
            rmask = (row < n_rows).astype(jnp.float32)
            dice_r = dice_r * rmask
            bce_r = bce_r * rmask
        dice_sum = jnp.sum(dice_r)
        bce_sum = jnp.sum(bce_r)
        lane = jax.lax.broadcasted_iota(jnp.int32, (1, 1, _LANE), 2)
        out_ref[...] += jnp.where(lane == 0, dice_sum,
                                  jnp.where(lane == 1, bce_sum, 0.0))


def boltzformer_loss(predictions, labels, *, target_block_bytes=1 << 20):
    """predictions, labels: (B, N, H, W), any float dtype (bf16 recommended).
    Returns scalar: mean dice loss (sigmoid, squared_pred) + mean BCE-with-logits."""
    B, N, H, W = predictions.shape
    # TODO(synk): the bicubic+antialias resize branch (pred HW != label HW) is not
    # implemented; the kernel assumes matching spatial shapes.
    assert labels.shape == predictions.shape

    R = B * N
    HW = H * W
    pred2d = predictions.reshape(R, HW)   # keep native dtype (no f32 upcast in HBM)
    tgt2d = labels.reshape(R, HW)

    itemsize = max(jnp.dtype(pred2d.dtype).itemsize, jnp.dtype(tgt2d.dtype).itemsize)
    sub = {4: 8, 2: 16, 1: 32}.get(itemsize, 8)   # sublane granularity per dtype

    NC = 2  # split row tiles across 2 TensorCores on v7x (harmless on v5e/v6e)
    tk_full = _round_up(HW, _LANE)
    if sub * tk_full * itemsize >= target_block_bytes:
        # Wide rows: keep tm minimal and tile the spatial axis to bound VMEM.
        tm = sub
        tk = max(_LANE, min(tk_full,
                            (target_block_bytes // (tm * itemsize)) // _LANE * _LANE))
    else:
        # Narrow rows: take the whole spatial extent, grow the row tile instead.
        tk = tk_full
        tm_ideal = max(sub, (target_block_bytes // (tk * itemsize)) // sub * sub)
        rows_per_core = _round_up(-(-R // NC), sub)
        tm = min(tm_ideal, rows_per_core, 1024)

    HWp = _round_up(HW, tk)
    n_k = HWp // tk
    n_row_tiles = -(-R // (NC * tm))
    Rp = NC * n_row_tiles * tm

    if (Rp, HWp) != (R, HW):
        pred2d = jnp.pad(pred2d, ((0, Rp - R), (0, HWp - HW)))
        tgt2d = jnp.pad(tgt2d, ((0, Rp - R), (0, HWp - HW)))

    kernel = functools.partial(
        _seg_loss_kernel,
        n_rows=R, n_cols=HW, tm=tm, tk=tk, n_row_tiles=n_row_tiles,
        need_row_mask=(Rp != R), need_col_mask=(HWp != HW))

    block_bytes = tm * tk * (jnp.dtype(pred2d.dtype).itemsize
                             + jnp.dtype(tgt2d.dtype).itemsize)
    vmem_limit = int(min(64 << 20, max(2 * block_bytes + (4 << 20), 16 << 20)))

    sums = pl.pallas_call(
        kernel,
        out_shape=jax.ShapeDtypeStruct((NC, 1, _LANE), jnp.float32),
        grid_spec=pltpu.PrefetchScalarGridSpec(
            num_scalar_prefetch=0,
            grid=(NC, n_row_tiles, n_k),
            in_specs=[
                pl.BlockSpec((tm, tk), lambda c, i, k: (c * n_row_tiles + i, k)),
                pl.BlockSpec((tm, tk), lambda c, i, k: (c * n_row_tiles + i, k)),
            ],
            out_specs=pl.BlockSpec((1, 1, _LANE), lambda c, i, k: (c, 0, 0)),
            scratch_shapes=[
                pltpu.VMEM((tm, 1), jnp.float32),   # intersection partials
                pltpu.VMEM((tm, 1), jnp.float32),   # denominator partials
                pltpu.VMEM((tm, 1), jnp.float32),   # per-row BCE partials
            ],
        ),
        compiler_params=pltpu.CompilerParams(
            dimension_semantics=("parallel", "arbitrary", "arbitrary"),
            vmem_limit_bytes=vmem_limit),
    )(pred2d, tgt2d)

    dice_mean = jnp.sum(sums[:, 0, 0]) / R
    bce_mean = jnp.sum(sums[:, 0, 1]) / (R * HW)
    return dice_mean + bce_mean


def _reference_loss(preds, labels):
    x = preds.astype(jnp.float32)
    t = labels.astype(jnp.float32)
    s = jax.nn.sigmoid(x)
    inter = jnp.sum(t * s, axis=(2, 3))
    ground = jnp.sum(t * t, axis=(2, 3))
    predo = jnp.sum(s * s, axis=(2, 3))
    dice = jnp.mean(1.0 - (2.0 * inter + SMOOTH_NR) / (ground + predo + SMOOTH_DR))
    bce = jnp.mean(jnp.maximum(x, 0.0) - x * t + jnp.log1p(jnp.exp(-jnp.abs(x))))
    return dice + bce


if __name__ == "__main__":
    key = jax.random.PRNGKey(0)
    k1, k2 = jax.random.split(key)
    B, N, H, W = 2, 4, 16, 16
    predictions = jax.random.normal(k1, (B, N, H, W), dtype=jnp.float32)
    labels = (jax.random.uniform(k2, (B, N, H, W)) > 0.5).astype(jnp.float32)

    loss = jax.jit(boltzformer_loss)(predictions, labels)
    loss = jax.block_until_ready(loss)

    ref = _reference_loss(predictions, labels)
    assert jnp.allclose(loss, ref, atol=1e-5, rtol=1e-5), (loss, ref)
    print("KERNEL_OK")
</pallas_src>

<mosaic_0001>
module attributes {stable_mosaic.version = 11 : i64} {
  func.func @_seg_loss_kernel(%arg0: i32, %arg1: i32, %arg2: i32, %arg3: memref<8x256xf32, #tpu.memory_space<vmem>>, %arg4: memref<8x256xf32, #tpu.memory_space<vmem>>, %arg5: memref<1x1x128xf32, #tpu.memory_space<vmem>>, %arg6: memref<8x1xf32, #tpu.memory_space<vmem>>, %arg7: memref<8x1xf32, #tpu.memory_space<vmem>>, %arg8: memref<8x1xf32, #tpu.memory_space<vmem>>) attributes {dimension_semantics = [#tpu.dimension_semantics<parallel>, #tpu.dimension_semantics<arbitrary>, #tpu.dimension_semantics<arbitrary>], iteration_bounds = array<i64: 2, 1, 1>, scalar_prefetch = 0 : i64, scratch_operands = 3 : i64, tpu.core_type = #tpu.core_type<tc>, window_params = [{transform_indices = @transform_0, window_bounds = array<i64: 8, 256>}, {transform_indices = @transform_1, window_bounds = array<i64: 8, 256>}, {transform_indices = @transform_2, window_bounds = array<i64: 1, 1, 128>}]} {
    %c0_i32 = arith.constant 0 : i32
    %0 = arith.cmpi eq, %arg1, %c0_i32 : i32
    %c0_i32_0 = arith.constant 0 : i32
    %1 = arith.cmpi eq, %arg2, %c0_i32_0 : i32
    %2 = arith.andi %0, %1 : i1
    %3 = arith.extui %2 : i1 to i32
    %c0_i32_1 = arith.constant 0 : i32
    %4 = arith.cmpi ne, %3, %c0_i32_1 : i32
    scf.if %4 {
      %cst_28 = arith.constant 0.000000e+00 : f32
      %49 = vector.broadcast %cst_28 : f32 to vector<1x1x128xf32>
      %c0_29 = arith.constant 0 : index
      %c0_30 = arith.constant 0 : index
      %c0_31 = arith.constant 0 : index
      %50 = vector.load %arg5[%c0_29, %c0_30, %c0_31] : memref<1x1x128xf32, #tpu.memory_space<vmem>>, vector<1x1x128xf32>
      tpu.vector_store %arg5[%c0_29, %c0_30, %c0_31], %49 {strides = array<i32>} : memref<1x1x128xf32, #tpu.memory_space<vmem>>, vector<1x1x128xf32>,
    } else {
    }
    %c0_i32_2 = arith.constant 0 : i32
    %5 = arith.cmpi eq, %arg2, %c0_i32_2 : i32
    %6 = arith.extui %5 : i1 to i32
    %c0_i32_3 = arith.constant 0 : i32
    %7 = arith.cmpi ne, %6, %c0_i32_3 : i32
    scf.if %7 {
      %cst_28 = arith.constant 0.000000e+00 : f32
      %49 = vector.broadcast %cst_28 : f32 to vector<8x1xf32>
      %c0_29 = arith.constant 0 : index
      %c0_30 = arith.constant 0 : index
      %50 = vector.load %arg6[%c0_29, %c0_30] : memref<8x1xf32, #tpu.memory_space<vmem>>, vector<8x1xf32>
      tpu.vector_store %arg6[%c0_29, %c0_30], %49 {strides = array<i32>} : memref<8x1xf32, #tpu.memory_space<vmem>>, vector<8x1xf32>,
      %cst_31 = arith.constant 0.000000e+00 : f32
      %51 = vector.broadcast %cst_31 : f32 to vector<8x1xf32>
      %c0_32 = arith.constant 0 : index
      %c0_33 = arith.constant 0 : index
      %52 = vector.load %arg7[%c0_32, %c0_33] : memref<8x1xf32, #tpu.memory_space<vmem>>, vector<8x1xf32>
      tpu.vector_store %arg7[%c0_32, %c0_33], %51 {strides = array<i32>} : memref<8x1xf32, #tpu.memory_space<vmem>>, vector<8x1xf32>,
      %cst_34 = arith.constant 0.000000e+00 : f32
      %53 = vector.broadcast %cst_34 : f32 to vector<8x1xf32>
      %c0_35 = arith.constant 0 : index
      %c0_36 = arith.constant 0 : index
      %54 = vector.load %arg8[%c0_35, %c0_36] : memref<8x1xf32, #tpu.memory_space<vmem>>, vector<8x1xf32>
      tpu.vector_store %arg8[%c0_35, %c0_36], %53 {strides = array<i32>} : memref<8x1xf32, #tpu.memory_space<vmem>>, vector<8x1xf32>,
    } else {
    }
    %c0 = arith.constant 0 : index
    %c0_4 = arith.constant 0 : index
    %8 = vector.load %arg3[%c0, %c0_4] : memref<8x256xf32, #tpu.memory_space<vmem>>, vector<8x256xf32>
    %c0_5 = arith.constant 0 : index
    %c0_6 = arith.constant 0 : index
    %9 = vector.load %arg4[%c0_5, %c0_6] : memref<8x256xf32, #tpu.memory_space<vmem>>, vector<8x256xf32>
    %10 = math.absf %8 : vector<8x256xf32>
    %cst = arith.constant 0.000000e+00 : f32
    %11 = vector.broadcast %cst : f32 to vector<8x256xf32>
    %12 = arith.subf %11, %10 : vector<8x256xf32>
    %13 = math.exp %12 : vector<8x256xf32>
    %cst_7 = arith.constant 0.000000e+00 : f32
    %14 = vector.broadcast %cst_7 : f32 to vector<8x256xf32>
    %15 = arith.cmpf oge, %8, %14 : vector<8x256xf32>
    %cst_8 = arith.constant 1.000000e+00 : f32
    %16 = vector.broadcast %cst_8 : f32 to vector<8x256xf32>
    %17 = arith.select %15, %16, %13 : vector<8x256xi1>, vector<8x256xf32>
    %cst_9 = arith.constant 1.000000e+00 : f32
    %18 = vector.broadcast %cst_9 : f32 to vector<8x256xf32>
    %19 = arith.addf %18, %13 : vector<8x256xf32>
    %20 = arith.divf %17, %19 : vector<8x256xf32>
    %cst_10 = arith.constant 0.000000e+00 : f32
    %21 = vector.broadcast %cst_10 : f32 to vector<8x256xf32>
    %22 = arith.maximumf %8, %21 : vector<8x256xf32>
    %23 = arith.mulf %8, %9 : vector<8x256xf32>
    %24 = arith.subf %22, %23 : vector<8x256xf32>
    %25 = math.log1p %13 : vector<8x256xf32>
    %26 = arith.addf %24, %25 : vector<8x256xf32>
    %27 = arith.mulf %20, %20 : vector<8x256xf32>
    %c0_11 = arith.constant 0 : index
    %c0_12 = arith.constant 0 : index
    %28 = vector.load %arg6[%c0_11, %c0_12] : memref<8x1xf32, #tpu.memory_space<vmem>>, vector<8x1xf32>
    %29 = arith.mulf %9, %20 : vector<8x256xf32>
    %cst_13 = arith.constant dense<0.000000e+00> : vector<8xf32>
    %30 = vector.multi_reduction <add>, %29, %cst_13 [1] : vector<8x256xf32> to vector<8xf32>
    %31 = vector.shape_cast %30 : vector<8xf32> to vector<8x1xf32>
    %32 = arith.addf %28, %31 : vector<8x1xf32>
    %c0_14 = arith.constant 0 : index
    %c0_15 = arith.constant 0 : index
    %33 = vector.load %arg6[%c0_14, %c0_15] : memref<8x1xf32, #tpu.memory_space<vmem>>, vector<8x1xf32>
    tpu.vector_store %arg6[%c0_14, %c0_15], %32 {strides = array<i32>} : memref<8x1xf32, #tpu.memory_space<vmem>>, vector<8x1xf32>,
    %c0_16 = arith.constant 0 : index
    %c0_17 = arith.constant 0 : index
    %34 = vector.load %arg7[%c0_16, %c0_17] : memref<8x1xf32, #tpu.memory_space<vmem>>, vector<8x1xf32>
    %35 = arith.mulf %9, %9 : vector<8x256xf32>
    %36 = arith.addf %35, %27 : vector<8x256xf32>
    %cst_18 = arith.constant dense<0.000000e+00> : vector<8xf32>
    %37 = vector.multi_reduction <add>, %36, %cst_18 [1] : vector<8x256xf32> to vector<8xf32>
    %38 = vector.shape_cast %37 : vector<8xf32> to vector<8x1xf32>
    %39 = arith.addf %34, %38 : vector<8x1xf32>
    %c0_19 = arith.constant 0 : index
    %c0_20 = arith.constant 0 : index
    %40 = vector.load %arg7[%c0_19, %c0_20] : memref<8x1xf32, #tpu.memory_space<vmem>>, vector<8x1xf32>
    tpu.vector_store %arg7[%c0_19, %c0_20], %39 {strides = array<i32>} : memref<8x1xf32, #tpu.memory_space<vmem>>, vector<8x1xf32>,
    %c0_21 = arith.constant 0 : index
    %c0_22 = arith.constant 0 : index
    %41 = vector.load %arg8[%c0_21, %c0_22] : memref<8x1xf32, #tpu.memory_space<vmem>>, vector<8x1xf32>
    %cst_23 = arith.constant dense<0.000000e+00> : vector<8xf32>
    %42 = vector.multi_reduction <add>, %26, %cst_23 [1] : vector<8x256xf32> to vector<8xf32>
    %43 = vector.shape_cast %42 : vector<8xf32> to vector<8x1xf32>
    %44 = arith.addf %41, %43 : vector<8x1xf32>
    %c0_24 = arith.constant 0 : index
    %c0_25 = arith.constant 0 : index
    %45 = vector.load %arg8[%c0_24, %c0_25] : memref<8x1xf32, #tpu.memory_space<vmem>>, vector<8x1xf32>
    tpu.vector_store %arg8[%c0_24, %c0_25], %44 {strides = array<i32>} : memref<8x1xf32, #tpu.memory_space<vmem>>, vector<8x1xf32>,
    %c0_i32_26 = arith.constant 0 : i32
    %46 = arith.cmpi eq, %arg2, %c0_i32_26 : i32
    %47 = arith.extui %46 : i1 to i32
    %c0_i32_27 = arith.constant 0 : i32
    %48 = arith.cmpi ne, %47, %c0_i32_27 : i32
    scf.if %48 {
      %c0_28 = arith.constant 0 : index
      %c0_29 = arith.constant 0 : index
      %49 = vector.load %arg6[%c0_28, %c0_29] : memref<8x1xf32, #tpu.memory_space<vmem>>, vector<8x1xf32>
      %cst_30 = arith.constant 2.000000e+00 : f32
      %50 = vector.broadcast %cst_30 : f32 to vector<8x1xf32>
      %51 = arith.mulf %50, %49 : vector<8x1xf32>
      %cst_31 = arith.constant 9.99999974E-6 : f32
      %52 = vector.broadcast %cst_31 : f32 to vector<8x1xf32>
      %53 = arith.addf %51, %52 : vector<8x1xf32>
      %c0_32 = arith.constant 0 : index
      %c0_33 = arith.constant 0 : index
      %54 = vector.load %arg7[%c0_32, %c0_33] : memref<8x1xf32, #tpu.memory_space<vmem>>, vector<8x1xf32>
      %cst_34 = arith.constant 9.99999974E-6 : f32
      %55 = vector.broadcast %cst_34 : f32 to vector<8x1xf32>
      %56 = arith.addf %54, %55 : vector<8x1xf32>
      %57 = arith.divf %53, %56 : vector<8x1xf32>
      %cst_35 = arith.constant 1.000000e+00 : f32
      %58 = vector.broadcast %cst_35 : f32 to vector<8x1xf32>
      %59 = arith.subf %58, %57 : vector<8x1xf32>
      %c0_36 = arith.constant 0 : index
      %c0_37 = arith.constant 0 : index
      %60 = vector.load %arg8[%c0_36, %c0_37] : memref<8x1xf32, #tpu.memory_space<vmem>>, vector<8x1xf32>
      %61 = tpu.iota {dimensions = array<i32: 0>} : vector<8x1xi32>
      %c1_i32 = arith.constant 1 : i32
      %62 = arith.muli %arg0, %c1_i32 : i32
      %63 = arith.addi %62, %arg1 : i32
      %c8_i32 = arith.constant 8 : i32
      %64 = arith.muli %63, %c8_i32 : i32
      %65 = vector.broadcast %64 : i32 to vector<8x1xi32>
      %66 = arith.addi %61, %65 : vector<8x1xi32>
      %c8_i32_38 = arith.constant 8 : i32
      %67 = vector.broadcast %c8_i32_38 : i32 to vector<8x1xi32>
      %68 = arith.cmpi slt, %66, %67 : vector<8x1xi32>
      %69 = arith.extui %68 : vector<8x1xi1> to vector<8x1xi32>
      %70 = arith.sitofp %69 : vector<8x1xi32> to vector<8x1xf32>
      %71 = arith.mulf %59, %70 : vector<8x1xf32>
      %72 = arith.mulf %60, %70 : vector<8x1xf32>
      %73 = vector.shape_cast %71 : vector<8x1xf32> to vector<1x8x1xf32>
      %cst_39 = arith.constant dense<0.000000e+00> : vector<1xf32>
      %74 = vector.multi_reduction <add>, %73, %cst_39 [1, 2] : vector<1x8x1xf32> to vector<1xf32>
      %75 = vector.shape_cast %74 : vector<1xf32> to vector<1x1x1xf32>
      %76 = vector.extract %75[0, 0, 0] : f32 from vector<1x1x1xf32>
      %77 = vector.shape_cast %72 : vector<8x1xf32> to vector<1x8x1xf32>
      %cst_40 = arith.constant dense<0.000000e+00> : vector<1xf32>
      %78 = vector.multi_reduction <add>, %77, %cst_40 [1, 2] : vector<1x8x1xf32> to vector<1xf32>
      %79 = vector.shape_cast %78 : vector<1xf32> to vector<1x1x1xf32>
      %80 = vector.extract %79[0, 0, 0] : f32 from vector<1x1x1xf32>
      %81 = tpu.iota {dimensions = array<i32: 2>} : vector<1x1x128xi32>
      %c0_41 = arith.constant 0 : index
      %c0_42 = arith.constant 0 : index
      %c0_43 = arith.constant 0 : index
      %82 = vector.load %arg5[%c0_41, %c0_42, %c0_43] : memref<1x1x128xf32, #tpu.memory_space<vmem>>, vector<1x1x128xf32>
      %c0_i32_44 = arith.constant 0 : i32
      %83 = vector.broadcast %c0_i32_44 : i32 to vector<1x1x128xi32>
      %84 = arith.cmpi eq, %81, %83 : vector<1x1x128xi32>
      %c1_i32_45 = arith.constant 1 : i32
      %85 = vector.broadcast %c1_i32_45 : i32 to vector<1x1x128xi32>
      %86 = arith.cmpi eq, %81, %85 : vector<1x1x128xi32>
      %cst_46 = arith.constant 0.000000e+00 : f32
      %87 = vector.broadcast %80 : f32 to vector<1x1x128xf32>
      %88 = vector.broadcast %cst_46 : f32 to vector<1x1x128xf32>
      %89 = arith.select %86, %87, %88 : vector<1x1x128xi1>, vector<1x1x128xf32>
      %90 = vector.broadcast %76 : f32 to vector<1x1x128xf32>
      %91 = arith.select %84, %90, %89 : vector<1x1x128xi1>, vector<1x1x128xf32>
      %92 = arith.addf %82, %91 : vector<1x1x128xf32>
      %c0_47 = arith.constant 0 : index
      %c0_48 = arith.constant 0 : index
      %c0_49 = arith.constant 0 : index
      %93 = vector.load %arg5[%c0_47, %c0_48, %c0_49] : memref<1x1x128xf32, #tpu.memory_space<vmem>>, vector<1x1x128xf32>
      tpu.vector_store %arg5[%c0_47, %c0_48, %c0_49], %92 {strides = array<i32>} : memref<1x1x128xf32, #tpu.memory_space<vmem>>, vector<1x1x128xf32>,
    } else {
    }
    return
  }
  func.func @transform_0(%arg0: i32, %arg1: i32, %arg2: i32) -> (i32, i32) {
    %c1_i32 = arith.constant 1 : i32
    %0 = arith.muli %arg0, %c1_i32 : i32
    %1 = arith.addi %0, %arg1 : i32
    %c0_i32 = arith.constant 0 : i32
    return %1, %arg2 : i32, i32
  }
  func.func @transform_1(%arg0: i32, %arg1: i32, %arg2: i32) -> (i32, i32) {
    %c1_i32 = arith.constant 1 : i32
    %0 = arith.muli %arg0, %c1_i32 : i32
    %1 = arith.addi %0, %arg1 : i32
    %c0_i32 = arith.constant 0 : i32
    return %1, %arg2 : i32, i32
  }
  func.func @transform_2(%arg0: i32, %arg1: i32, %arg2: i32) -> (i32, i32, i32) {
    %c0_i32 = arith.constant 0 : i32
    %c0_i32_0 = arith.constant 0 : i32
    %c0_i32_1 = arith.constant 0 : i32
    return %arg0, %c0_i32, %c0_i32_0 : i32, i32, i32
  }
}

</mosaic_0001>

<llo_original>
// kernel: boltzformer_loss.1
$region0: #{boltzformer_loss.1}
  #allocation0 [shape = 'u32[]', space=smem, size = 0x4, offset = 0x4, fixed_abs, tag = 'smem constant byte address 0x4 - core index']
  #allocation1 [shape = 'u32[144,128]{1,0:T(1,128)}', space=vmem, size = 0x12000, scoped, tag = 'internal scratch']
  #allocation2 [shape = 'f32[8,1]{1,0:T(8,128)}', space=vmem, size = 0x1000, scoped, tag = 'scratch operand']
  #allocation3 [shape = 'f32[8,1]{1,0:T(8,128)}', space=vmem, size = 0x1000, scoped, tag = 'scratch operand']
  #allocation4 [shape = 'f32[8,1]{1,0:T(8,128)}', space=vmem, size = 0x1000, scoped, tag = 'scratch operand']
  %s0 = inlined_call_operand.vmem [shape: f32[16,256], index: 0, kind: input, shape index: {}]
  %s1 = inlined_call_operand.vmem [shape: f32[16,256], index: 1, kind: input, shape index: {}]
  %s2 = inlined_call_operand.vmem [shape: f32[2,1,128], index: 2, kind: output, shape index: {}]
  %s3 = sld [smem:[#allocation0]]
  $region53: #{boltzformer_loss.1} parent=0
    _
  %s5 = ssub.s32 1, %s3
  %s6 = scalar_select 0, %s5, %s3
  loop: start=0, step=1, limit=4
  $region2: #{boltzformer_loss.1} parent=0 // loop_pre_header
    _
  $region3: #{boltzformer_loss.1} parent=0 // loop_header
    %s8 = sphi 0, %s12
    %p9 = scmp.ge.s32.totalorder %s8, 4
    %s15 = sphi 0, %s34
    %s16 = sphi 0, %s30
    %s17 = sphi 0, %s26
    %s18 = sphi 0, %s15
    %s19 = sphi 0, %s16
    %s20 = sphi 0, %s17
    %s21 = sphi 0, %s18
    %s22 = sphi 0, %s19
    %s23 = sphi 0, %s20
    %s41 = sphi 0, %s43
    %s44 = sphi 0, %s41
    %s45 = sphi 0, %s44
    %s61 = sphi 0, %s45
    %s71 = sphi 0, %s73
    %s74 = sphi 0, %s71
    %s75 = sphi 0, %s74
    %s91 = sphi 0, %s75
    %s97 = sphi 0, %s99
    %s100 = sphi 0, %s97
    %s101 = sphi 0, %s100
    %s117 = sphi 0, %s101
  $region4: #{boltzformer_loss.1} parent=0 // loop_header_branch
    %11 = sbr.rel (%p9) target = $region8
  $region5: #{boltzformer_loss.1} parent=0 // loop_body
    %s13 = ssub.s32 %s8, 1
    %s14 = ssub.s32 %s8, 2
    %s24 = sadd.s32 1, %s17
    %p25 = scmp.ge.s32.totalorder %s24, 1
    %s26 = scalar_select %p25, 0, %s24
    %s27 = sadd.s32 1, %s16
    %s28 = scalar_select %p25, %s27, %s16
    %p29 = scmp.ge.s32.totalorder %s28, 1
    %s30 = scalar_select %p29, 0, %s28
    %s31 = sadd.s32 1, %s15
    %s32 = scalar_select %p29, %s31, %s15
    %p33 = scmp.ge.s32.totalorder %s32, 2
    %s34 = scalar_select %p33, 0, %s32
    %s35 = sadd.s32 %s15, %s16
    %s36 = sadd.s32 %s34, %s30
    %s37 = ssub.s32 %s35, %s36
    %s38 = ssub.s32 %s17, %s26
    %s39 = sor.u32 %s37, %s38
    %p40 = scmp.eq.s32.totalorder %s39, 0
    %s42 = sadd.s32 %s41, 1
    %s43 = scalar_select %p40, %s41, %s42
    %p46 = pneg %p40
    %p47 = scmp.eq.s32.totalorder %s8, 1
    %p48 = por %p46, %p47
    %p49 = scmp.ne.s32.totalorder %s41, %s44
    %p50 = scmp.eq.s32.totalorder %s8, 0
    %p51 = por %p49, %p50
    %p52 = scmp.ne.s32.totalorder %s41, %s44
    %p53 = scmp.eq.s32.totalorder %s13, 1
    %p54 = por %p52, %p53
    %p55 = scmp.ne.s32.totalorder %s44, %s45
    %p56 = scmp.eq.s32.totalorder %s13, 0
    %p57 = por %p55, %p56
    %p58 = scmp.ne.s32.totalorder %s44, %s45
    %p59 = scmp.eq.s32.totalorder %s14, 1
    %p60 = por %p58, %p59
    %p62 = scmp.ne.s32.totalorder %s45, %s61
    %p63 = scmp.eq.s32.totalorder %s14, 0
    %p64 = por %p62, %p63
    %s65 = sadd.s32 %s15, %s16
    %s66 = sadd.s32 %s34, %s30
    %s67 = ssub.s32 %s65, %s66
    %s68 = ssub.s32 %s17, %s26
    %s69 = sor.u32 %s67, %s68
    %p70 = scmp.eq.s32.totalorder %s69, 0
    %s72 = sadd.s32 %s71, 1
    %s73 = scalar_select %p70, %s71, %s72
    %p76 = pneg %p70
    %p77 = scmp.eq.s32.totalorder %s8, 1
    %p78 = por %p76, %p77
    %p79 = scmp.ne.s32.totalorder %s71, %s74
    %p80 = scmp.eq.s32.totalorder %s8, 0
    %p81 = por %p79, %p80
    %p82 = scmp.ne.s32.totalorder %s71, %s74
    %p83 = scmp.eq.s32.totalorder %s13, 1
    %p84 = por %p82, %p83
    %p85 = scmp.ne.s32.totalorder %s74, %s75
    %p86 = scmp.eq.s32.totalorder %s13, 0
    %p87 = por %p85, %p86
    %p88 = scmp.ne.s32.totalorder %s74, %s75
    %p89 = scmp.eq.s32.totalorder %s14, 1
    %p90 = por %p88, %p89
    %p92 = scmp.ne.s32.totalorder %s75, %s91
    %p93 = scmp.eq.s32.totalorder %s14, 0
    %p94 = por %p92, %p93
    %s95 = ssub.s32 %s15, %s34
    %p96 = scmp.eq.s32.totalorder %s95, 0
    %s98 = sadd.s32 %s97, 1
    %s99 = scalar_select %p96, %s97, %s98
    %p102 = pneg %p96
    %p103 = scmp.eq.s32.totalorder %s8, 1
    %p104 = por %p102, %p103
    %p105 = scmp.ne.s32.totalorder %s97, %s100
    %p106 = scmp.eq.s32.totalorder %s8, 0
    %p107 = por %p105, %p106
    %p108 = scmp.ne.s32.totalorder %s97, %s100
    %p109 = scmp.eq.s32.totalorder %s13, 1
    %p110 = por %p108, %p109
    %p111 = scmp.ne.s32.totalorder %s100, %s101
    %p112 = scmp.eq.s32.totalorder %s13, 0
    %p113 = por %p111, %p112
    %p114 = scmp.ne.s32.totalorder %s100, %s101
    %p115 = scmp.eq.s32.totalorder %s14, 1
    %p116 = por %p114, %p115
    %p118 = scmp.ne.s32.totalorder %s101, %s117
    %p119 = scmp.eq.s32.totalorder %s14, 0
    %p120 = por %p118, %p119
    %p121 = scmp.le.s32.totalorder 1, %s8
    %p122 = scmp.lt.s32.totalorder %s8, 3
    %p123 = pnand %p121, %p122
    %p124 = pneg %p123
    // Predicated region
    $region9: #{boltzformer_loss.1} parent=5 // pred_check
      _
    $region10: #{boltzformer_loss.1} parent=5 // pred_check_branch
      %126 = sbr.rel (%p123) target = $region12
    $region11: #{boltzformer_loss.1} parent=5 // pred_region
      %s127 = ssub.s32 %s8, 1
    $region12: #{boltzformer_loss.1} parent=5 // pred_fallthru
      _
    %p128 = scmp.lt.s32.totalorder %s8, 2
    // Predicated region
    $region13: #{boltzformer_loss.1} parent=5 // pred_check
      %p129 = pneg %p128
    $region14: #{boltzformer_loss.1} parent=5 // pred_check_branch
      %131 = sbr.rel (%p129) target = $region16
    $region15: #{boltzformer_loss.1} parent=5 // pred_region
      // Predicated region
      $region17: #{boltzformer_loss.1} parent=15 // pred_check
        %p132 = pneg %p51
      $region18: #{boltzformer_loss.1} parent=15 // pred_check_branch
        %134 = sbr.rel (%p132) target = $region20
      $region19: #{boltzformer_loss.1} parent=15 // pred_region
        %s135 = sadd.s32 %s15, %s16
        %s136 = smul.u32 2, %s17
        %p137 = scmp.lt.s32.totalorder %s135, 1
        %s138 = scalar_select %p137, %s135, 1
        %p139 = scmp.lt.s32.totalorder %s136, 1
        %s140 = scalar_select %p139, %s136, 1
        %s141 = smul.addr %s138, 2
        %s142 = sadd.s32 %s140, %s141
        %s143 = smul.addr %s142, 8
        %s144 = scalar_lea.vmem %s0, %s143
        %s145 = sadd.s32 %s15, %s16
        %s146 = smul.u32 2, %s17
      $region20: #{boltzformer_loss.1} parent=15 // pred_fallthru
        _
      // Predicated region
      $region21: #{boltzformer_loss.1} parent=15 // pred_check
        %p147 = pneg %p81
      $region22: #{boltzformer_loss.1} parent=15 // pred_check_branch
        %149 = sbr.rel (%p147) target = $region24
      $region23: #{boltzformer_loss.1} parent=15 // pred_region
        %s150 = sadd.s32 %s15, %s16
        %s151 = smul.u32 2, %s17
        %p152 = scmp.lt.s32.totalorder %s150, 1
        %s153 = scalar_select %p152, %s150, 1
        %p154 = scmp.lt.s32.totalorder %s151, 1
        %s155 = scalar_select %p154, %s151, 1
        %s156 = smul.addr %s153, 2
        %s157 = sadd.s32 %s155, %s156
        %s158 = smul.addr %s157, 8
        %s159 = scalar_lea.vmem %s1, %s158
        %s160 = sadd.s32 %s15, %s16
        %s161 = smul.u32 2, %s17
      $region24: #{boltzformer_loss.1} parent=15 // pred_fallthru
        _
    $region16: #{boltzformer_loss.1} parent=5 // pred_fallthru
      _
    %p162 = scmp.le.s32.totalorder 1, %s8
    %p163 = scmp.lt.s32.totalorder %s8, 3
    %p164 = pnand %p162, %p163
    %p165 = pneg %p164
    // Predicated region
    $region25: #{boltzformer_loss.1} parent=5 // pred_check
      _
    $region26: #{boltzformer_loss.1} parent=5 // pred_check_branch
      %167 = sbr.rel (%p164) target = $region28
    $region27: #{boltzformer_loss.1} parent=5 // pred_region
      %s168 = ssub.s32 %s8, 1
      %s169 = sadd.s32 %s18, %s19
      %s170 = smul.u32 2, %s20
      %p171 = scmp.lt.s32.totalorder %s169, 1
      %s172 = scalar_select %p171, %s169, 1
      %p173 = scmp.lt.s32.totalorder %s170, 1
      %s174 = scalar_select %p173, %s170, 1
      %s175 = smul.addr %s172, 2
      %s176 = sadd.s32 %s174, %s175
      %s177 = smul.addr %s176, 8
      %s178 = scalar_lea.vmem %s0, %s177
      %p179 = pneg %p57
      %p180 = pneg %p54
      %s181 = sadd.s32 %s18, %s19
      %s182 = smul.u32 2, %s20
      %p183 = scmp.lt.s32.totalorder %s181, 1
      %s184 = scalar_select %p183, %s181, 1
      %p185 = scmp.lt.s32.totalorder %s182, 1
      %s186 = scalar_select %p185, %s182, 1
      %s187 = smul.addr %s184, 2
      %s188 = sadd.s32 %s186, %s187
      %s189 = smul.addr %s188, 8
      %s190 = scalar_lea.vmem %s1, %s189
      %p191 = pneg %p87
      %p192 = pneg %p84
      %p193 = pneg %p113
      %p194 = pneg %p110
      %p195 = scmp.lt.s32.totalorder %s18, 1
      %s196 = scalar_select %p195, %s18, 1
      %s197 = scalar_lea.vmem %s2, %s196
      %s198 = sadd.s32 %s18, %s19
      %s199 = smul.u32 2, %s20
      %p200 = scmp.lt.s32.totalorder %s198, 1
      %s201 = scalar_select %p200, %s198, 1
      %p202 = scmp.lt.s32.totalorder %s199, 1
      %s203 = scalar_select %p202, %s199, 1
      %s204 = smul.addr %s201, 2
      %s205 = sadd.s32 %s203, %s204
      %s206 = smul.addr %s205, 8
      %s207 = scalar_lea.vmem %s0, %s206
      %s208 = sadd.s32 %s18, %s19
      %s209 = smul.u32 2, %s20
      %s210 = sadd.s32 %s18, %s19
      %s211 = smul.u32 2, %s20
      %p212 = scmp.lt.s32.totalorder %s210, 1
      %s213 = scalar_select %p212, %s210, 1
      %p214 = scmp.lt.s32.totalorder %s211, 1
      %s215 = scalar_select %p214, %s211, 1
      %s216 = smul.addr %s213, 2
      %s217 = sadd.s32 %s215, %s216
      %s218 = smul.addr %s217, 8
      %s219 = scalar_lea.vmem %s1, %s218
      %s220 = sadd.s32 %s18, %s19
      %s221 = smul.u32 2, %s20
      %p222 = scmp.lt.s32.totalorder %s18, 1
      %s223 = scalar_select %p222, %s18, 1
      %s224 = scalar_lea.vmem %s2, %s223
      %p225 = scmp.eq.s32.totalorder %s19, 0
      %p226 = scmp.eq.s32.totalorder %s20, 0
      %p227 = pnand %p225, %p226
      %p228 = pneg %p227
      // Predicated region
      $region29: #{boltzformer_loss.1} parent=27 // pred_check
        _
      $region30: #{boltzformer_loss.1} parent=27 // pred_check_branch
        %230 = sbr.rel (%p227) target = $region32
      $region31: #{boltzformer_loss.1} parent=27 // pred_region
        %231 = vst [vmem:[%s224] sm:$0x1] 0.0
      $region32: #{boltzformer_loss.1} parent=27 // pred_fallthru
        _
      // Predicated region
      $region33: #{boltzformer_loss.1} parent=27 // pred_check
        %p232 = pneg %p226
      $region34: #{boltzformer_loss.1} parent=27 // pred_check_branch
        %234 = sbr.rel (%p232) target = $region36
      $region35: #{boltzformer_loss.1} parent=27 // pred_region
        %vm235 = vcmask 7168
        %236 = vst.msk [vmem:[#allocation2] sm:$0xff] %vm235, 0.0
        %237 = vst.msk [vmem:[#allocation3] sm:$0xff] %vm235, 0.0
        %238 = vst.msk [vmem:[#allocation4] sm:$0xff] %vm235, 0.0
      $region36: #{boltzformer_loss.1} parent=27 // pred_fallthru
        _
      %v239 = vld [vmem:[%s207] sm:$0xff]
      %v240 = vld [vmem:[%s207 + $0x8] sm:$0xff]
      %v241 = vld [vmem:[%s219] sm:$0xff]
      %v242 = vld [vmem:[%s219 + $0x8] sm:$0xff]
      %v243 = vand.u32 2147483647, %v239
      %v244 = vand.u32 2147483647, %v240
      %v245 = vsub.f32 0.0, %v243
      %v246 = vsub.f32 0.0, %v244
      %v247 = vmul.f32 %v245, 1.442695
      %v248 = vpow.pop %v247
      %v249 = vmul.f32 %v246, 1.442695
      %v250 = vpow.pop %v249
      %vm251 = vcmp.ge.f32.partialorder %v239, 0.0
      %vm252 = vcmp.ge.f32.partialorder %v240, 0.0
      %v253 = vsel %vm251, 1.0, %v248
      %v254 = vsel %vm252, 1.0, %v250
      %v255 = vadd.f32 %v248, 1.0
      %v256 = vadd.f32 %v250, 1.0
      %v257 = vrcp.pop %v255
      %v258 = vmul.f32 %v253, %v257
      %v259 = vrcp.pop %v256
      %v260 = vmul.f32 %v254, %v259
      %v261 = vmax.f32 %v239, 0.0
      %v262 = vmax.f32 %v240, 0.0
      %v263 = vmul.f32 %v239, %v241
      %v264 = vmul.f32 %v240, %v242
      %v265 = vsub.f32 %v261, %v263
      %v266 = vsub.f32 %v262, %v264
      %v267 = vadd.f32 %v248, 1.0
      %v268 = vlog2.pop %v267
      %v269 = vmul.f32 %v268, 0.6931472
      %v270 = vmul.f32 -0.5, %v248
      %v271 = vadd.f32 %v270, 1.0
      %v272 = vmul.f32 %v271, %v248
      %v273 = vand.u32 2147483647, %v248
      %vm274 = vcmp.lt.f32.partialorder %v273, 0.0004427343
      %v275 = vsel %vm274, %v272, %v269
      %v276 = vadd.f32 %v250, 1.0
      %v277 = vlog2.pop %v276
      %v278 = vmul.f32 %v277, 0.6931472
      %v279 = vmul.f32 -0.5, %v250
      %v280 = vadd.f32 %v279, 1.0
      %v281 = vmul.f32 %v280, %v250
      %v282 = vand.u32 2147483647, %v250
      %vm283 = vcmp.lt.f32.partialorder %v282, 0.0004427343
      %v284 = vsel %vm283, %v281, %v278
      %v285 = vadd.f32 %v265, %v275
      %v286 = vadd.f32 %v266, %v284
      %v287 = vmul.f32 %v258, %v258
      %v288 = vmul.f32 %v260, %v260
      %v289 = vld [vmem:[#allocation2] sm:$0xff]
      %v290 = vmul.f32 %v241, %v258
      %v291 = vmul.f32 %v242, %v260
      %v292 = vadd.f32 %v290, %v291
      %293 = vadd.xlane.f32.xlu0 %v292
      %v294 = vpop.xlane.xlu0 %293
      %v295 = vadd.f32 %v289, %v294
      %vm296 = vcmask 7168
      %297 = vst.msk [vmem:[#allocation2] sm:$0xff] %vm296, %v295
      %v298 = vld [vmem:[#allocation3] sm:$0xff]
      %v299 = vmul.f32 %v241, %v241
      %v300 = vmul.f32 %v242, %v242
      %v301 = vadd.f32 %v299, %v287
      %v302 = vadd.f32 %v300, %v288
      %v303 = vadd.f32 %v301, %v302
      %304 = vadd.xlane.f32.xlu0 %v303
      %v305 = vpop.xlane.xlu0 %304
      %v306 = vadd.f32 %v298, %v305
      %307 = vst.msk [vmem:[#allocation3] sm:$0xff] %vm296, %v306
      %v308 = vld [vmem:[#allocation4] sm:$0xff]
      %v309 = vadd.f32 %v285, %v286
      %310 = vadd.xlane.f32.xlu0 %v309
      %v311 = vpop.xlane.xlu0 %310
      %v312 = vadd.f32 %v308, %v311
      %313 = vst.msk [vmem:[#allocation4] sm:$0xff] %vm296, %v312
      // Predicated region
      $region37: #{boltzformer_loss.1} parent=27 // pred_check
        %p314 = pneg %p226
      $region38: #{boltzformer_loss.1} parent=27 // pred_check_branch
        %316 = sbr.rel (%p314) target = $region40
      $region39: #{boltzformer_loss.1} parent=27 // pred_region
        %v317 = vld [vmem:[#allocation2] sm:$0xff]
        %v318 = vmul.f32 %v317, 2.0
        %v319 = vadd.f32 %v318, 1e-05
        %v320 = vld [vmem:[#allocation3] sm:$0xff]
        %v321 = vadd.f32 %v320, 1e-05
        %v322 = vrcp.pop %v321
        %v323 = vmul.f32 %v319, %v322
        %v324 = vsub.f32 1.0, %v323
        %v325 = vld [vmem:[#allocation4] sm:$0xff]
        %v326 = vlaneseq
        %v327 = vshrl.u32 %v326, 7
        %s328 = sadd.s32 %s18, %s19
        %s329 = smul.u32 %s328, 8
        %v330 = vstv %s329
        %v331 = vadd.s32 %v327, %v330
        %vm332 = vcmp.lt.s32.totalorder %v331, 8
        %v333 = vsel %vm332, 1, 0
        %v334 = vcvt.s32.f32 %v333
        %v335 = vmul.f32 %v324, %v334
        %v336 = vmul.f32 %v325, %v334
        %v337 = vsel %vm296, %v335, 0.0
        %338 = vadd.xlane.f32.xlu0 %v337
        %v339 = vpop.xlane.xlu0 %338
        %v340 = vrot.slane %v339, 4
        %v341 = vadd.f32 %v339, %v340
        %v342 = vrot.slane %v341, 2
        %v343 = vadd.f32 %v341, %v342
        %v344 = vrot.slane %v343, 1
        %v345 = vadd.f32 %v343, %v344
        %s346 = vtos %v345
        %v347 = vsel %vm296, %v336, 0.0
        %348 = vadd.xlane.f32.xlu0 %v347
        %v349 = vpop.xlane.xlu0 %348
        %v350 = vrot.slane %v349, 4
        %v351 = vadd.f32 %v349, %v350
        %v352 = vrot.slane %v351, 2
        %v353 = vadd.f32 %v351, %v352
        %v354 = vrot.slane %v353, 1
        %v355 = vadd.f32 %v353, %v354
        %s356 = vtos %v355
        %v357 = vlaneseq
        %v358 = vand.u32 %v357, 127
        %v359 = vld [vmem:[%s224] sm:$0x1]
        %vm360 = vcmp.eq.s32.totalorder %v358, 0
        %vm361 = vcmp.eq.s32.totalorder %v358, 1
        %v362 = vstv %s356
        %v363 = vsel %vm361, %v362, 0.0
        %v364 = vstv %s346
        %v365 = vsel %vm360, %v364, %v363
        %v366 = vadd.f32 %v359, %v365
        %367 = vst [vmem:[%s224] sm:$0x1] %v366
      $region40: #{boltzformer_loss.1} parent=27 // pred_fallthru
        _
      %p368 = scmp.lt.s32.totalorder %s18, 1
      %s369 = scalar_select %p368, %s18, 1
      %s370 = scalar_lea.vmem %s2, %s369
      // Predicated region
      $region41: #{boltzformer_loss.1} parent=27 // pred_check
        %p371 = pneg %p110
      $region42: #{boltzformer_loss.1} parent=27 // pred_check_branch
        %373 = sbr.rel (%p371) target = $region44
      $region43: #{boltzformer_loss.1} parent=27 // pred_region
        _
      $region44: #{boltzformer_loss.1} parent=27 // pred_fallthru
        _
    $region28: #{boltzformer_loss.1} parent=5 // pred_fallthru
      _
    %p374 = scmp.le.s32.totalorder 2, %s8
    // Predicated region
    $region45: #{boltzformer_loss.1} parent=5 // pred_check
      %p375 = pneg %p374
    $region46: #{boltzformer_loss.1} parent=5 // pred_check_branch
      %377 = sbr.rel (%p375) target = $region48
    $region47: #{boltzformer_loss.1} parent=5 // pred_region
      %s378 = ssub.s32 %s8, 2
      // Predicated region
      $region49: #{boltzformer_loss.1} parent=47 // pred_check
        %p379 = pneg %p116
      $region50: #{boltzformer_loss.1} parent=47 // pred_check_branch
        %381 = sbr.rel (%p379) target = $region52
      $region51: #{boltzformer_loss.1} parent=47 // pred_region
        %p382 = scmp.lt.s32.totalorder %s21, 1
        %s383 = scalar_select %p382, %s21, 1
        %s384 = scalar_lea.vmem %s2, %s383
      $region52: #{boltzformer_loss.1} parent=47 // pred_fallthru
        _
    $region48: #{boltzformer_loss.1} parent=5 // pred_fallthru
      _
  $region6: #{boltzformer_loss.1} parent=0 // loop_footer
    %s12 = sadd.s32 1, %s8
  $region7: #{boltzformer_loss.1} parent=0 // loop_footer_branch
    %7 = sbr.rel target = $region3
  $region8: #{boltzformer_loss.1} parent=0 // loop_exit
    _

</llo_original>
